<compile_context>
chip_gen: v5e
topology: v5e:2x2
jax: 0.10.0
libtpu: 0.0.40
codegen_flags: <defaults>
</compile_context>

<pallas_src>
import functools

import jax
import jax.numpy as jnp
import numpy as np
from jax.experimental import pallas as pl
from jax.experimental.pallas import tpu as pltpu

EMB = 128          # embedding width (already lane-dense)
HIDDEN = 64        # logical hidden width of Linear(256, 64)
NCLS = 3           # logical output width of Linear(64, 3)
HIDDEN_PAD = 128   # padded hidden width (lane-dense)
NCLS_PAD = 128     # padded padded-weight output width (lane-dense)
BIAS_ROWS = 8      # sublane-padded bias pack: row 0 = b1, row 1 = b2


def _round_up(x, m):
    return ((x + m - 1) // m) * m


def _mlp_kernel(x_ref,     # (bt, 256)   fused [user | sku] embedding rows
                w1_ref,    # (256, 128)  Linear(256, 64) weight, [in, out], padded
                w2_ref,    # (128, 128)  Linear(64, 3) weight, [in, out], padded
                bias_ref,  # (8, 128)    row 0 = b1 (padded), row 1 = b2 (padded)
                out_ref):  # (bt, 3)
    h = jnp.dot(x_ref[...], w1_ref[...], preferred_element_type=jnp.float32)
    h = jnp.maximum(h + bias_ref[0:1, :], 0.0)            # Linear(256, 64) + ReLU
    out = jnp.dot(h, w2_ref[...], preferred_element_type=jnp.float32)
    out = out + bias_ref[1:2, :]                           # Linear(64, 3)
    out_ref[...] = out[:, :NCLS].astype(out_ref.dtype)     # narrow (bt, 3) writeback


def prepare_params(params):
    """Pad weights to lane-dense shapes and pack both biases into one buffer."""
    user_table, sku_table, w1, b1, w2, b2 = params
    w1_pad = jnp.zeros((2 * EMB, HIDDEN_PAD), jnp.float32).at[:, :HIDDEN].set(w1)
    w2_pad = (jnp.zeros((HIDDEN_PAD, NCLS_PAD), jnp.float32)
              .at[:HIDDEN, :NCLS].set(w2))
    bias_pad = (jnp.zeros((BIAS_ROWS, NCLS_PAD), jnp.float32)
                .at[0, :HIDDEN].set(b1.reshape(-1))
                .at[1, :NCLS].set(b2.reshape(-1)))
    return (user_table, sku_table, w1_pad, w2_pad, bias_pad)


def _dense_forward(x, w1_pad, w2_pad, bias_pad):
    """Tiny-batch fast path: plain JAX math on the padded weights."""
    h = jnp.maximum(x @ w1_pad + bias_pad[0:1, :], 0.0)
    return (h @ w2_pad + bias_pad[1:2, :])[:, :NCLS]


@functools.partial(jax.jit, static_argnames=("block_b",))
def embedding_learning_forward_batched(user_ids, product_skus, prepared,
                                       *, block_b=512):
    """user_ids, product_skus: (B,) int32. Returns (B, 3) float32 logits."""
    user_table, sku_table, w1_pad, w2_pad, bias_pad = prepared

    # Clamp indices to the table extent (PyTorch would raise on OOB ids).
    user_ids = jnp.clip(user_ids.astype(jnp.int32), 0, user_table.shape[0] - 1)
    product_skus = jnp.clip(product_skus.astype(jnp.int32), 0,
                            sku_table.shape[0] - 1)
    B = user_ids.shape[0]

    # Fused (B, 256) activation slab: gather user rows into [:, :128] and sku
    # rows into [:, 128:]. XLA fuses gather + concat + pad into one producer;
    # tables themselves never enter the kernel's VMEM.
    x = jnp.concatenate([jnp.take(user_table, user_ids, axis=0),
                         jnp.take(sku_table, product_skus, axis=0)], axis=-1)

    if B <= 8:
        # pallas_call fixed overhead dominates at this size; skip Pallas.
        return _dense_forward(x, w1_pad, w2_pad, bias_pad)

    # Batch tile: as large as block_b allows, but keep >= 2 grid steps so the
    # "parallel" batch axis actually splits across both TensorCores on v7x.
    b8 = _round_up(B, 8)
    bt = min(block_b, max(8, _round_up((b8 + 1) // 2, 8)))
    padded_b = _round_up(B, bt)
    if padded_b != B:
        x = jnp.pad(x, ((0, padded_b - B), (0, 0)))

    grid = (padded_b // bt,)

    # Double-buffered VMEM footprint estimate; only raise the scoped-VMEM limit
    # (v5e default is 16 MiB) if a very large block_b sweep needs it.
    w_bytes = (2 * EMB * HIDDEN_PAD + HIDDEN_PAD * NCLS_PAD
               + BIAS_ROWS * NCLS_PAD) * 4
    footprint = 2 * (bt * 2 * EMB * 4        # fused input tile
                     + bt * NCLS_PAD * 4     # output tile (lane-padded in VMEM)
                     + w_bytes)
    vmem_limit = None
    if footprint > 12 * 1024 * 1024:
        vmem_limit = min(int(footprint * 5 // 4), 48 * 1024 * 1024)

    cost = pl.CostEstimate(
        flops=2 * padded_b * (2 * EMB * HIDDEN_PAD + HIDDEN_PAD * NCLS_PAD),
        transcendentals=0,
        bytes_accessed=padded_b * (2 * EMB + NCLS) * 4 + w_bytes,
    )

    out = pl.pallas_call(
        _mlp_kernel,
        out_shape=jax.ShapeDtypeStruct((padded_b, NCLS), jnp.float32),
        grid_spec=pltpu.PrefetchScalarGridSpec(
            num_scalar_prefetch=0,
            grid=grid,
            in_specs=[
                pl.BlockSpec((bt, 2 * EMB), lambda i: (i, 0)),
                # Weights/bias: constant block index -> stay resident in VMEM.
                pl.BlockSpec((2 * EMB, HIDDEN_PAD), lambda i: (0, 0)),
                pl.BlockSpec((HIDDEN_PAD, NCLS_PAD), lambda i: (0, 0)),
                pl.BlockSpec((BIAS_ROWS, NCLS_PAD), lambda i: (0, 0)),
            ],
            out_specs=pl.BlockSpec((bt, NCLS), lambda i: (i, 0)),
        ),
        compiler_params=pltpu.CompilerParams(
            dimension_semantics=("parallel",),
            vmem_limit_bytes=vmem_limit),
        cost_estimate=cost,
    )(x, w1_pad, w2_pad, bias_pad)

    return out[:B]


def embedding_learning_forward(user_id, product_sku, prepared):
    """Module-equivalent forward: scalar ids -> (1, 3) logits."""
    user_ids = jnp.asarray(user_id, jnp.int32).reshape(1)
    skus = jnp.asarray(product_sku, jnp.int32).reshape(1)
    return embedding_learning_forward_batched(user_ids, skus, prepared)


def init_params(key, num_user, num_product):
    """Deterministic parameter init mirroring the PyTorch module's shapes.

    MLP weights are stored as [in, out] (transposed vs. nn.Linear's [out, in])
    so the kernel computes y = x @ W + b == PyTorch's x @ W.T + b.
    """
    k = jax.random.split(key, 6)
    user_table = jax.random.normal(k[0], (num_user, EMB), jnp.float32)
    sku_table = jax.random.normal(k[1], (num_product, EMB), jnp.float32)
    lim1 = 1.0 / np.sqrt(2 * EMB)
    w1 = jax.random.uniform(k[2], (2 * EMB, HIDDEN), jnp.float32, -lim1, lim1)
    b1 = jax.random.uniform(k[3], (HIDDEN,), jnp.float32, -lim1, lim1)
    lim2 = 1.0 / np.sqrt(HIDDEN)
    w2 = jax.random.uniform(k[4], (HIDDEN, NCLS), jnp.float32, -lim2, lim2)
    b2 = jax.random.uniform(k[5], (NCLS,), jnp.float32, -lim2, lim2)
    return (user_table, sku_table, w1, b1, w2, b2)


def reference_forward(user_id, product_sku, params):
    user_table, sku_table, w1, b1, w2, b2 = params
    concat = jnp.concatenate(
        [user_table[user_id], sku_table[product_sku]], axis=0).reshape(1, 2 * EMB)
    h = jnp.maximum(concat @ w1 + b1, 0.0)
    return h @ w2 + b2


def reference_forward_batched(user_ids, product_skus, params):
    user_table, sku_table, w1, b1, w2, b2 = params
    concat = jnp.concatenate(
        [user_table[user_ids], sku_table[product_skus]], axis=-1)
    h = jnp.maximum(concat @ w1 + b1, 0.0)
    return h @ w2 + b2


if __name__ == "__main__":
    num_user, num_product = 16, 32
    key = jax.random.PRNGKey(0)
    params = init_params(key, num_user, num_product)
    prepared = prepare_params(params)

    # --- batched forward (the Pallas throughput path) ------------------------
    kb = jax.random.split(jax.random.PRNGKey(0), 2)
    B = 64
    user_ids = jax.random.randint(kb[0], (B,), 0, num_user, jnp.int32)
    skus = jax.random.randint(kb[1], (B,), 0, num_product, jnp.int32)
    out_b = jax.block_until_ready(
        embedding_learning_forward_batched(user_ids, skus, prepared))
    ref_b = reference_forward_batched(user_ids, skus, params)
    np.testing.assert_allclose(np.asarray(out_b), np.asarray(ref_b),
                               rtol=1e-5, atol=1e-4)
    assert out_b.shape == (B, NCLS) and out_b.dtype == jnp.float32

    # --- module-equivalent scalar forward: (user_id, sku) -> (1, 3) ----------
    user_id = jnp.int32(3)
    product_sku = jnp.int32(7)
    out = jax.block_until_ready(
        embedding_learning_forward(user_id, product_sku, prepared))
    ref = reference_forward(user_id, product_sku, params)
    np.testing.assert_allclose(np.asarray(out), np.asarray(ref),
                               rtol=1e-5, atol=1e-4)
    assert out.shape == (1, NCLS) and out.dtype == jnp.float32

    print("KERNEL_OK")
</pallas_src>

<mosaic_0001>
module attributes {stable_mosaic.version = 11 : i64} {
  func.func @_mlp_kernel(%arg0: i32, %arg1: memref<32x256xf32, #tpu.memory_space<vmem>>, %arg2: memref<256x128xf32, #tpu.memory_space<vmem>>, %arg3: memref<128x128xf32, #tpu.memory_space<vmem>>, %arg4: memref<8x128xf32, #tpu.memory_space<vmem>>, %arg5: memref<32x3xf32, #tpu.memory_space<vmem>>) attributes {dimension_semantics = [#tpu.dimension_semantics<parallel>], iteration_bounds = array<i64: 2>, scalar_prefetch = 0 : i64, scratch_operands = 0 : i64, tpu.core_type = #tpu.core_type<tc>, window_params = [{transform_indices = @transform_0, window_bounds = array<i64: 32, 256>}, {pipeline_mode = #tpu.pipeline_mode<synchronous>, transform_indices = @transform_1, window_bounds = array<i64: 256, 128>}, {pipeline_mode = #tpu.pipeline_mode<synchronous>, transform_indices = @transform_2, window_bounds = array<i64: 128, 128>}, {pipeline_mode = #tpu.pipeline_mode<synchronous>, transform_indices = @transform_3, window_bounds = array<i64: 8, 128>}, {transform_indices = @transform_4, window_bounds = array<i64: 32, 3>}]} {
    %c0 = arith.constant 0 : index
    %c0_0 = arith.constant 0 : index
    %0 = vector.load %arg1[%c0, %c0_0] : memref<32x256xf32, #tpu.memory_space<vmem>>, vector<32x256xf32>
    %c0_1 = arith.constant 0 : index
    %c0_2 = arith.constant 0 : index
    %1 = vector.load %arg2[%c0_1, %c0_2] : memref<256x128xf32, #tpu.memory_space<vmem>>, vector<256x128xf32>
    %cst = arith.constant dense<0.000000e+00> : vector<32x128xf32>
    %2 = tpu.matmul %0, %1, %cst {dimension_numbers = #tpu.dot_dimension_numbers<[1], [0], [0], [1], [0, 0, 1, 1], [], []>} : vector<32x256xf32>, vector<256x128xf32>, vector<32x128xf32> -> vector<32x128xf32>
    %c0_3 = arith.constant 0 : index
    %c0_4 = arith.constant 0 : index
    %3 = vector.load %arg4[%c0_3, %c0_4] : memref<8x128xf32, #tpu.memory_space<vmem>>, vector<1x128xf32>
    %4 = vector.broadcast %3 : vector<1x128xf32> to vector<32x128xf32>
    %5 = arith.addf %2, %4 : vector<32x128xf32>
    %cst_5 = arith.constant 0.000000e+00 : f32
    %6 = vector.broadcast %cst_5 : f32 to vector<32x128xf32>
    %7 = arith.maximumf %5, %6 : vector<32x128xf32>
    %c0_6 = arith.constant 0 : index
    %c0_7 = arith.constant 0 : index
    %8 = vector.load %arg3[%c0_6, %c0_7] : memref<128x128xf32, #tpu.memory_space<vmem>>, vector<128x128xf32>
    %cst_8 = arith.constant dense<0.000000e+00> : vector<32x128xf32>
    %9 = tpu.matmul %7, %8, %cst_8 {dimension_numbers = #tpu.dot_dimension_numbers<[1], [0], [0], [1], [0, 0, 1, 1], [], []>} : vector<32x128xf32>, vector<128x128xf32>, vector<32x128xf32> -> vector<32x128xf32>
    %c1 = arith.constant 1 : index
    %c0_9 = arith.constant 0 : index
    %10 = vector.load %arg4[%c1, %c0_9] : memref<8x128xf32, #tpu.memory_space<vmem>>, vector<1x128xf32>
    %11 = vector.broadcast %10 : vector<1x128xf32> to vector<32x128xf32>
    %12 = arith.addf %9, %11 : vector<32x128xf32>
    %13 = vector.extract_strided_slice %12 {offsets = [0, 0], sizes = [32, 3], strides = [1, 1]} : vector<32x128xf32> to vector<32x3xf32>
    %c0_10 = arith.constant 0 : index
    %c0_11 = arith.constant 0 : index
    %14 = vector.load %arg5[%c0_10, %c0_11] : memref<32x3xf32, #tpu.memory_space<vmem>>, vector<32x3xf32>
    tpu.vector_store %arg5[%c0_10, %c0_11], %13 {strides = array<i32>} : memref<32x3xf32, #tpu.memory_space<vmem>>, vector<32x3xf32>,
    return
  }
  func.func @transform_0(%arg0: i32) -> (i32, i32) {
    %c0_i32 = arith.constant 0 : i32
    %c0_i32_0 = arith.constant 0 : i32
    return %arg0, %c0_i32 : i32, i32
  }
  func.func @transform_1(%arg0: i32) -> (i32, i32) {
    %c0_i32 = arith.constant 0 : i32
    %c0_i32_0 = arith.constant 0 : i32
    %c0_i32_1 = arith.constant 0 : i32
    return %c0_i32, %c0_i32_0 : i32, i32
  }
  func.func @transform_2(%arg0: i32) -> (i32, i32) {
    %c0_i32 = arith.constant 0 : i32
    %c0_i32_0 = arith.constant 0 : i32
    %c0_i32_1 = arith.constant 0 : i32
    return %c0_i32, %c0_i32_0 : i32, i32
  }
  func.func @transform_3(%arg0: i32) -> (i32, i32) {
    %c0_i32 = arith.constant 0 : i32
    %c0_i32_0 = arith.constant 0 : i32
    %c0_i32_1 = arith.constant 0 : i32
    return %c0_i32, %c0_i32_0 : i32, i32
  }
  func.func @transform_4(%arg0: i32) -> (i32, i32) {
    %c0_i32 = arith.constant 0 : i32
    %c0_i32_0 = arith.constant 0 : i32
    return %arg0, %c0_i32 : i32, i32
  }
}

</mosaic_0001>

<llo_original>
// kernel: embedding_learning_forward_batched.1
$region0: #{embedding_learning_forward_batched.1}
  #allocation0 [shape = 'u32[]', space=smem, size = 0x4, offset = 0x4, fixed_abs, tag = 'smem constant byte address 0x4 - core index']
  #allocation1 [shape = 'u32[72,128]{1,0:T(1,128)}', space=vmem, size = 0x9000, scoped, tag = 'internal scratch']
  %s0 = inlined_call_operand.vmem [shape: f32[64,256], index: 0, kind: input, shape index: {}]
  %s1 = inlined_call_operand.vmem [shape: f32[256,128], index: 1, kind: input, shape index: {}]
  %s2 = inlined_call_operand.vmem [shape: f32[128,128], index: 2, kind: input, shape index: {}]
  %s3 = inlined_call_operand.vmem [shape: f32[8,128], index: 3, kind: input, shape index: {}]
  %s4 = inlined_call_operand.vmem [shape: f32[64,3], index: 4, kind: output, shape index: {}]
  %s5 = sld [smem:[#allocation0]]
  $region49: #{embedding_learning_forward_batched.1} parent=0
    _
  %s7 = ssub.s32 1, %s5
  %s8 = scalar_select 0, %s7, %s5
  loop: start=0, step=1, limit=4
  $region2: #{embedding_learning_forward_batched.1} parent=0 // loop_pre_header
    _
  $region3: #{embedding_learning_forward_batched.1} parent=0 // loop_header
    %s10 = sphi 0, %s14
    %p11 = scmp.ge.s32.totalorder %s10, 4
    %s20 = sphi 0, %s22
    %s23 = sphi 0, %s20
    %s24 = sphi 0, %s23
    %s40 = sphi 0, %s24
    %s44 = sphi 0, %s44
    %s46 = sphi 0, %s44
    %s47 = sphi 0, %s46
    %s61 = sphi 0, %s47
    %s65 = sphi 0, %s65
    %s67 = sphi 0, %s65
    %s68 = sphi 0, %s67
    %s82 = sphi 0, %s68
    %s86 = sphi 0, %s86
    %s88 = sphi 0, %s86
    %s89 = sphi 0, %s88
    %s103 = sphi 0, %s89
    %s109 = sphi 0, %s111
    %s112 = sphi 0, %s109
    %s113 = sphi 0, %s112
    %s129 = sphi 0, %s113
  $region4: #{embedding_learning_forward_batched.1} parent=0 // loop_header_branch
    %13 = sbr.rel (%p11) target = $region8
  $region5: #{embedding_learning_forward_batched.1} parent=0 // loop_body
    %s15 = ssub.s32 %s10, 1
    %s16 = ssub.s32 %s10, 2
    %s17 = sadd.s32 %s10, 1
    %s18 = ssub.s32 %s10, %s17
    %p19 = scmp.eq.s32.totalorder %s18, 0
    %s21 = sadd.s32 %s20, 1
    %s22 = scalar_select %p19, %s20, %s21
    %p25 = pneg %p19
    %p26 = scmp.eq.s32.totalorder %s10, 1
    %p27 = por %p25, %p26
    %p28 = scmp.ne.s32.totalorder %s20, %s23
    %p29 = scmp.eq.s32.totalorder %s10, 0
    %p30 = por %p28, %p29
    %p31 = scmp.ne.s32.totalorder %s20, %s23
    %p32 = scmp.eq.s32.totalorder %s15, 1
    %p33 = por %p31, %p32
    %p34 = scmp.ne.s32.totalorder %s23, %s24
    %p35 = scmp.eq.s32.totalorder %s15, 0
    %p36 = por %p34, %p35
    %p37 = scmp.ne.s32.totalorder %s23, %s24
    %p38 = scmp.eq.s32.totalorder %s16, 1
    %p39 = por %p37, %p38
    %p41 = scmp.ne.s32.totalorder %s24, %s40
    %p42 = scmp.eq.s32.totalorder %s16, 0
    %p43 = por %p41, %p42
    %s45 = sadd.s32 %s44, 1
    %p48 = scmp.eq.s32.totalorder %s10, 1
    %p49 = scmp.ne.s32.totalorder %s44, %s46
    %p50 = scmp.eq.s32.totalorder %s10, 0
    %p51 = por %p49, %p50
    %p52 = scmp.ne.s32.totalorder %s44, %s46
    %p53 = scmp.eq.s32.totalorder %s15, 1
    %p54 = por %p52, %p53
    %p55 = scmp.ne.s32.totalorder %s46, %s47
    %p56 = scmp.eq.s32.totalorder %s15, 0
    %p57 = por %p55, %p56
    %p58 = scmp.ne.s32.totalorder %s46, %s47
    %p59 = scmp.eq.s32.totalorder %s16, 1
    %p60 = por %p58, %p59
    %p62 = scmp.ne.s32.totalorder %s47, %s61
    %p63 = scmp.eq.s32.totalorder %s16, 0
    %p64 = por %p62, %p63
    %s66 = sadd.s32 %s65, 1
    %p69 = scmp.eq.s32.totalorder %s10, 1
    %p70 = scmp.ne.s32.totalorder %s65, %s67
    %p71 = scmp.eq.s32.totalorder %s10, 0
    %p72 = por %p70, %p71
    %p73 = scmp.ne.s32.totalorder %s65, %s67
    %p74 = scmp.eq.s32.totalorder %s15, 1
    %p75 = por %p73, %p74
    %p76 = scmp.ne.s32.totalorder %s67, %s68
    %p77 = scmp.eq.s32.totalorder %s15, 0
    %p78 = por %p76, %p77
    %p79 = scmp.ne.s32.totalorder %s67, %s68
    %p80 = scmp.eq.s32.totalorder %s16, 1
    %p81 = por %p79, %p80
    %p83 = scmp.ne.s32.totalorder %s68, %s82
    %p84 = scmp.eq.s32.totalorder %s16, 0
    %p85 = por %p83, %p84
    %s87 = sadd.s32 %s86, 1
    %p90 = scmp.eq.s32.totalorder %s10, 1
    %p91 = scmp.ne.s32.totalorder %s86, %s88
    %p92 = scmp.eq.s32.totalorder %s10, 0
    %p93 = por %p91, %p92
    %p94 = scmp.ne.s32.totalorder %s86, %s88
    %p95 = scmp.eq.s32.totalorder %s15, 1
    %p96 = por %p94, %p95
    %p97 = scmp.ne.s32.totalorder %s88, %s89
    %p98 = scmp.eq.s32.totalorder %s15, 0
    %p99 = por %p97, %p98
    %p100 = scmp.ne.s32.totalorder %s88, %s89
    %p101 = scmp.eq.s32.totalorder %s16, 1
    %p102 = por %p100, %p101
    %p104 = scmp.ne.s32.totalorder %s89, %s103
    %p105 = scmp.eq.s32.totalorder %s16, 0
    %p106 = por %p104, %p105
    %s107 = ssub.s32 %s10, %s17
    %p108 = scmp.eq.s32.totalorder %s107, 0
    %s110 = sadd.s32 %s109, 1
    %s111 = scalar_select %p108, %s109, %s110
    %p114 = pneg %p108
    %p115 = scmp.eq.s32.totalorder %s10, 1
    %p116 = por %p114, %p115
    %p117 = scmp.ne.s32.totalorder %s109, %s112
    %p118 = scmp.eq.s32.totalorder %s10, 0
    %p119 = por %p117, %p118
    %p120 = scmp.ne.s32.totalorder %s109, %s112
    %p121 = scmp.eq.s32.totalorder %s15, 1
    %p122 = por %p120, %p121
    %p123 = scmp.ne.s32.totalorder %s112, %s113
    %p124 = scmp.eq.s32.totalorder %s15, 0
    %p125 = por %p123, %p124
    %p126 = scmp.ne.s32.totalorder %s112, %s113
    %p127 = scmp.eq.s32.totalorder %s16, 1
    %p128 = por %p126, %p127
    %p130 = scmp.ne.s32.totalorder %s113, %s129
    %p131 = scmp.eq.s32.totalorder %s16, 0
    %p132 = por %p130, %p131
    %p133 = scmp.le.s32.totalorder 1, %s10
    %p134 = scmp.lt.s32.totalorder %s10, 3
    %p135 = pnand %p133, %p134
    %p136 = pneg %p135
    // Predicated region
    $region9: #{embedding_learning_forward_batched.1} parent=5 // pred_check
      _
    $region10: #{embedding_learning_forward_batched.1} parent=5 // pred_check_branch
      %138 = sbr.rel (%p135) target = $region12
    $region11: #{embedding_learning_forward_batched.1} parent=5 // pred_region
      %s139 = ssub.s32 %s10, 1
      // Predicated region
      $region13: #{embedding_learning_forward_batched.1} parent=11 // pred_check
        %p140 = pneg %p57
      $region14: #{embedding_learning_forward_batched.1} parent=11 // pred_check_branch
        %142 = sbr.rel (%p140) target = $region16
      $region15: #{embedding_learning_forward_batched.1} parent=11 // pred_region
        _
      $region16: #{embedding_learning_forward_batched.1} parent=11 // pred_fallthru
        _
      // Predicated region
      $region17: #{embedding_learning_forward_batched.1} parent=11 // pred_check
        %p143 = pneg %p78
      $region18: #{embedding_learning_forward_batched.1} parent=11 // pred_check_branch
        %145 = sbr.rel (%p143) target = $region20
      $region19: #{embedding_learning_forward_batched.1} parent=11 // pred_region
        _
      $region20: #{embedding_learning_forward_batched.1} parent=11 // pred_fallthru
        _
      // Predicated region
      $region21: #{embedding_learning_forward_batched.1} parent=11 // pred_check
        %p146 = pneg %p99
      $region22: #{embedding_learning_forward_batched.1} parent=11 // pred_check_branch
        %148 = sbr.rel (%p146) target = $region24
      $region23: #{embedding_learning_forward_batched.1} parent=11 // pred_region
        _
      $region24: #{embedding_learning_forward_batched.1} parent=11 // pred_fallthru
        _
    $region12: #{embedding_learning_forward_batched.1} parent=5 // pred_fallthru
      _
    %p149 = scmp.lt.s32.totalorder %s10, 2
    // Predicated region
    $region25: #{embedding_learning_forward_batched.1} parent=5 // pred_check
      %p150 = pneg %p149
    $region26: #{embedding_learning_forward_batched.1} parent=5 // pred_check_branch
      %152 = sbr.rel (%p150) target = $region28
    $region27: #{embedding_learning_forward_batched.1} parent=5 // pred_region
      // Predicated region
      $region29: #{embedding_learning_forward_batched.1} parent=27 // pred_check
        %p153 = pneg %p30
      $region30: #{embedding_learning_forward_batched.1} parent=27 // pred_check_branch
        %155 = sbr.rel (%p153) target = $region32
      $region31: #{embedding_learning_forward_batched.1} parent=27 // pred_region
        %s156 = smul.u32 4, %s10
        %p157 = scmp.lt.s32.totalorder %s156, 7
        %s158 = scalar_select %p157, %s156, 7
        %s159 = smul.addr %s158, 2
        %s160 = smul.addr %s159, 8
        %s161 = scalar_lea.vmem %s0, %s160
        %s162 = smul.u32 4, %s10
      $region32: #{embedding_learning_forward_batched.1} parent=27 // pred_fallthru
        _
    $region28: #{embedding_learning_forward_batched.1} parent=5 // pred_fallthru
      _
    %p163 = scmp.le.s32.totalorder 1, %s10
    %p164 = scmp.lt.s32.totalorder %s10, 3
    %p165 = pnand %p163, %p164
    %p166 = pneg %p165
    // Predicated region
    $region33: #{embedding_learning_forward_batched.1} parent=5 // pred_check
      _
    $region34: #{embedding_learning_forward_batched.1} parent=5 // pred_check_branch
      %168 = sbr.rel (%p165) target = $region36
    $region35: #{embedding_learning_forward_batched.1} parent=5 // pred_region
      %s169 = ssub.s32 %s10, 1
      %s170 = smul.u32 4, %s15
      %p171 = scmp.lt.s32.totalorder %s170, 7
      %s172 = scalar_select %p171, %s170, 7
      %s173 = smul.addr %s172, 2
      %s174 = smul.addr %s173, 8
      %s175 = scalar_lea.vmem %s0, %s174
      %p176 = pneg %p36
      %p177 = pneg %p33
      %p178 = pneg %p57
      %p179 = pneg %p54
      %p180 = pneg %p78
      %p181 = pneg %p75
      %p182 = pneg %p99
      %p183 = pneg %p96
      %p184 = pneg %p125
      %p185 = pneg %p122
      %s186 = smul.u32 4, %s15
      %p187 = scmp.lt.s32.totalorder %s186, 7
      %s188 = scalar_select %p187, %s186, 7
      %s189 = smul.addr %s188, 8
      %s190 = scalar_lea.vmem %s4, %s189
      %s191 = smul.u32 4, %s15
      %p192 = scmp.lt.s32.totalorder %s191, 7
      %s193 = scalar_select %p192, %s191, 7
      %s194 = smul.addr %s193, 2
      %s195 = smul.addr %s194, 8
      %s196 = scalar_lea.vmem %s0, %s195
      %s197 = smul.u32 4, %s15
      %s198 = smul.u32 4, %s15
      %p199 = scmp.lt.s32.totalorder %s198, 7
      %s200 = scalar_select %p199, %s198, 7
      %s201 = smul.addr %s200, 8
      %s202 = scalar_lea.vmem %s4, %s201
      %s203 = smul.u32 4, %s15
      %v204 = vld [vmem:[%s196] sm:$0xff]
      %v205 = vld [vmem:[%s196 + $0x8] sm:$0xff]
      %v206 = vld [vmem:[%s196 + $0x10] sm:$0xff]
      %v207 = vld [vmem:[%s196 + $0x18] sm:$0xff]
      %v208 = vld [vmem:[%s196 + $0x20] sm:$0xff]
      %v209 = vld [vmem:[%s196 + $0x28] sm:$0xff]
      %v210 = vld [vmem:[%s196 + $0x30] sm:$0xff]
      %v211 = vld [vmem:[%s196 + $0x38] sm:$0xff]
      %v212 = vld [vmem:[%s1] sm:$0xff]
      %v213 = vld [vmem:[%s1 + $0x8] sm:$0xff]
      %v214 = vld [vmem:[%s1 + $0x10] sm:$0xff]
      %v215 = vld [vmem:[%s1 + $0x18] sm:$0xff]
      %v216 = vld [vmem:[%s1 + $0x20] sm:$0xff]
      %v217 = vld [vmem:[%s1 + $0x28] sm:$0xff]
      %v218 = vld [vmem:[%s1 + $0x30] sm:$0xff]
      %v219 = vld [vmem:[%s1 + $0x38] sm:$0xff]
      %v220 = vld [vmem:[%s1 + $0x40] sm:$0xff]
      %v221 = vld [vmem:[%s1 + $0x48] sm:$0xff]
      %v222 = vld [vmem:[%s1 + $0x50] sm:$0xff]
      %v223 = vld [vmem:[%s1 + $0x58] sm:$0xff]
      %v224 = vld [vmem:[%s1 + $0x60] sm:$0xff]
      %v225 = vld [vmem:[%s1 + $0x68] sm:$0xff]
      %v226 = vld [vmem:[%s1 + $0x70] sm:$0xff]
      %v227 = vld [vmem:[%s1 + $0x78] sm:$0xff]
      %v228 = vld [vmem:[%s1 + $0x80] sm:$0xff]
      %v229 = vld [vmem:[%s1 + $0x88] sm:$0xff]
      %v230 = vld [vmem:[%s1 + $0x90] sm:$0xff]
      %v231 = vld [vmem:[%s1 + $0x98] sm:$0xff]
      %v232 = vld [vmem:[%s1 + $0xa0] sm:$0xff]
      %v233 = vld [vmem:[%s1 + $0xa8] sm:$0xff]
      %v234 = vld [vmem:[%s1 + $0xb0] sm:$0xff]
      %v235 = vld [vmem:[%s1 + $0xb8] sm:$0xff]
      %v236 = vld [vmem:[%s1 + $0xc0] sm:$0xff]
      %v237 = vld [vmem:[%s1 + $0xc8] sm:$0xff]
      %v238 = vld [vmem:[%s1 + $0xd0] sm:$0xff]
      %v239 = vld [vmem:[%s1 + $0xd8] sm:$0xff]
      %v240 = vld [vmem:[%s1 + $0xe0] sm:$0xff]
      %v241 = vld [vmem:[%s1 + $0xe8] sm:$0xff]
      %v242 = vld [vmem:[%s1 + $0xf0] sm:$0xff]
      %v243 = vld [vmem:[%s1 + $0xf8] sm:$0xff]
      %v244 = vld [vmem:[%s3] sm:$0x1]
      %v245 = vperm.slane %v244, 0
      %246 = vmatpush.msra.mxu0 %v227
      %247 = vmatpush.msra.mxu0 %v226
      %248 = vmatpush.msra.mxu0 %v225
      %249 = vmatpush.msra.mxu0 %v224
      %250 = vmatpush.msra.mxu0 %v223
      %251 = vmatpush.msra.mxu0 %v222
      %252 = vmatpush.msra.mxu0 %v221
      %253 = vmatpush.msra.mxu0 %v220
      %254 = vmatpush.msra.mxu0 %v219
      %255 = vmatpush.msra.mxu0 %v218
      %256 = vmatpush.msra.mxu0 %v217
      %257 = vmatpush.msra.mxu0 %v216
      %258 = vmatpush.msra.mxu0 %v215
      %259 = vmatpush.msra.mxu0 %v214
      %260 = vmatpush.msra.mxu0 %v213
      %261 = vmatpush.msra.mxu0 %v212
      %262 = vmatmul.f32.gmra.mxu0 %v204
      %v263 = vpop.f32.mrf.mxu0
      %v264 = vadd.f32 %v245, %v263
      %265 = vmatmul.f32.gmra.mxu0 %v206
      %v266 = vpop.f32.mrf.mxu0
      %v267 = vadd.f32 %v245, %v266
      %268 = vmatmul.f32.gmra.mxu0 %v208
      %v269 = vpop.f32.mrf.mxu0
      %v270 = vadd.f32 %v245, %v269
      %271 = vmatmul.f32.gmra.mxu0 %v210
      %v272 = vpop.f32.mrf.mxu0
      %v273 = vadd.f32 %v245, %v272
      %274 = vdwg.mxu0
      %275 = vmatpush.msra.mxu0 %v243
      %276 = vmatpush.msra.mxu0 %v242
      %277 = vmatpush.msra.mxu0 %v241
      %278 = vmatpush.msra.mxu0 %v240
      %279 = vmatpush.msra.mxu0 %v239
      %280 = vmatpush.msra.mxu0 %v238
      %281 = vmatpush.msra.mxu0 %v237
      %282 = vmatpush.msra.mxu0 %v236
      %283 = vmatpush.msra.mxu0 %v235
      %284 = vmatpush.msra.mxu0 %v234
      %285 = vmatpush.msra.mxu0 %v233
      %286 = vmatpush.msra.mxu0 %v232
      %287 = vmatpush.msra.mxu0 %v231
      %288 = vmatpush.msra.mxu0 %v230
      %289 = vmatpush.msra.mxu0 %v229
      %290 = vmatpush.msra.mxu0 %v228
      %291 = vmatmul.f32.gmra.mxu0 %v205
      %v292 = vpop.f32.mrf.mxu0
      %v293 = vadd.f32 %v264, %v292
      %294 = vmatmul.f32.gmra.mxu0 %v207
      %v295 = vpop.f32.mrf.mxu0
      %v296 = vadd.f32 %v267, %v295
      %297 = vmatmul.f32.gmra.mxu0 %v209
      %v298 = vpop.f32.mrf.mxu0
      %v299 = vadd.f32 %v270, %v298
      %300 = vmatmul.f32.gmra.mxu0 %v211
      %v301 = vpop.f32.mrf.mxu0
      %v302 = vadd.f32 %v273, %v301
      %303 = vdwg.mxu0
      %v304 = vmax.f32 %v293, 0.0
      %v305 = vmax.f32 %v296, 0.0
      %v306 = vmax.f32 %v299, 0.0
      %v307 = vmax.f32 %v302, 0.0
      %v308 = vld [vmem:[%s2] sm:$0xff]
      %v309 = vld [vmem:[%s2 + $0x8] sm:$0xff]
      %v310 = vld [vmem:[%s2 + $0x10] sm:$0xff]
      %v311 = vld [vmem:[%s2 + $0x18] sm:$0xff]
      %v312 = vld [vmem:[%s2 + $0x20] sm:$0xff]
      %v313 = vld [vmem:[%s2 + $0x28] sm:$0xff]
      %v314 = vld [vmem:[%s2 + $0x30] sm:$0xff]
      %v315 = vld [vmem:[%s2 + $0x38] sm:$0xff]
      %v316 = vld [vmem:[%s2 + $0x40] sm:$0xff]
      %v317 = vld [vmem:[%s2 + $0x48] sm:$0xff]
      %v318 = vld [vmem:[%s2 + $0x50] sm:$0xff]
      %v319 = vld [vmem:[%s2 + $0x58] sm:$0xff]
      %v320 = vld [vmem:[%s2 + $0x60] sm:$0xff]
      %v321 = vld [vmem:[%s2 + $0x68] sm:$0xff]
      %v322 = vld [vmem:[%s2 + $0x70] sm:$0xff]
      %v323 = vld [vmem:[%s2 + $0x78] sm:$0xff]
      %v324 = vld [vmem:[%s3 + $0x1] sm:$0x1]
      %v325 = vperm.slane %v324, 0
      %326 = vmatpush.msra.mxu0 %v323
      %327 = vmatpush.msra.mxu0 %v322
      %328 = vmatpush.msra.mxu0 %v321
      %329 = vmatpush.msra.mxu0 %v320
      %330 = vmatpush.msra.mxu0 %v319
      %331 = vmatpush.msra.mxu0 %v318
      %332 = vmatpush.msra.mxu0 %v317
      %333 = vmatpush.msra.mxu0 %v316
      %334 = vmatpush.msra.mxu0 %v315
      %335 = vmatpush.msra.mxu0 %v314
      %336 = vmatpush.msra.mxu0 %v313
      %337 = vmatpush.msra.mxu0 %v312
      %338 = vmatpush.msra.mxu0 %v311
      %339 = vmatpush.msra.mxu0 %v310
      %340 = vmatpush.msra.mxu0 %v309
      %341 = vmatpush.msra.mxu0 %v308
      %342 = vmatmul.f32.gmra.mxu0 %v304
      %v343 = vpop.f32.mrf.mxu0
      %v344 = vadd.f32 %v325, %v343
      %345 = vmatmul.f32.gmra.mxu0 %v305
      %v346 = vpop.f32.mrf.mxu0
      %v347 = vadd.f32 %v325, %v346
      %348 = vmatmul.f32.gmra.mxu0 %v306
      %v349 = vpop.f32.mrf.mxu0
      %v350 = vadd.f32 %v325, %v349
      %351 = vmatmul.f32.gmra.mxu0 %v307
      %v352 = vpop.f32.mrf.mxu0
      %v353 = vadd.f32 %v325, %v352
      %354 = vdwg.mxu0
      %vm355 = vcmask 23552
      %356 = vst.msk [vmem:[%s202] sm:$0xff] %vm355, %v344
      %357 = vst.msk [vmem:[%s202 + $0x8] sm:$0xff] %vm355, %v347
      %358 = vst.msk [vmem:[%s202 + $0x10] sm:$0xff] %vm355, %v350
      %359 = vst.msk [vmem:[%s202 + $0x18] sm:$0xff] %vm355, %v353
      %s360 = smul.u32 4, %s15
      %p361 = scmp.lt.s32.totalorder %s360, 7
      %s362 = scalar_select %p361, %s360, 7
      %s363 = smul.addr %s362, 8
      %s364 = scalar_lea.vmem %s4, %s363
      // Predicated region
      $region37: #{embedding_learning_forward_batched.1} parent=35 // pred_check
        %p365 = pneg %p122
      $region38: #{embedding_learning_forward_batched.1} parent=35 // pred_check_branch
        %367 = sbr.rel (%p365) target = $region40
      $region39: #{embedding_learning_forward_batched.1} parent=35 // pred_region
        %s368 = smul.u32 4, %s15
      $region40: #{embedding_learning_forward_batched.1} parent=35 // pred_fallthru
        _
    $region36: #{embedding_learning_forward_batched.1} parent=5 // pred_fallthru
      _
    %p369 = scmp.le.s32.totalorder 2, %s10
    // Predicated region
    $region41: #{embedding_learning_forward_batched.1} parent=5 // pred_check
      %p370 = pneg %p369
    $region42: #{embedding_learning_forward_batched.1} parent=5 // pred_check_branch
      %372 = sbr.rel (%p370) target = $region44
    $region43: #{embedding_learning_forward_batched.1} parent=5 // pred_region
      %s373 = ssub.s32 %s10, 2
      // Predicated region
      $region45: #{embedding_learning_forward_batched.1} parent=43 // pred_check
        %p374 = pneg %p128
      $region46: #{embedding_learning_forward_batched.1} parent=43 // pred_check_branch
        %376 = sbr.rel (%p374) target = $region48
      $region47: #{embedding_learning_forward_batched.1} parent=43 // pred_region
        %s377 = smul.u32 4, %s16
        %p378 = scmp.lt.s32.totalorder %s377, 7
        %s379 = scalar_select %p378, %s377, 7
        %s380 = smul.addr %s379, 8
        %s381 = scalar_lea.vmem %s4, %s380
      $region48: #{embedding_learning_forward_batched.1} parent=43 // pred_fallthru
        _
    $region44: #{embedding_learning_forward_batched.1} parent=5 // pred_fallthru
      _
  $region6: #{embedding_learning_forward_batched.1} parent=0 // loop_footer
    %s14 = sadd.s32 1, %s10
  $region7: #{embedding_learning_forward_batched.1} parent=0 // loop_footer_branch
    %9 = sbr.rel target = $region3
  $region8: #{embedding_learning_forward_batched.1} parent=0 // loop_exit
    _

</llo_original>
